<compile_context>
chip_gen: v6e
topology: v6e:2x2x1
jax: 0.10.0
libtpu: 0.0.40
codegen_flags: <defaults>
</compile_context>

<pallas_src>
import jax
import jax.numpy as jnp
from jax.experimental import pallas as pl
from jax.experimental.pallas import tpu as pltpu


def attention_kernel(x_ref, w_ref, out_ref):
    # x_ref  : (bt, S, D) VMEM -- the only large operand streamed from HBM
    # w_ref  : (1, D)     VMEM -- w_eff = wv @ wm (the two Linears fused)
    # out_ref: (bt, D)    VMEM
    x = x_ref[...]                                      # (bt, S, D) f32
    w = w_ref[0]                                        # (D,)

    # Fused score s = x . w_eff  (bias dropped: softmax is shift-invariant).
    # VPU multiply + XLU lane reduce; result is lane-dense (bt, S).
    s = jnp.sum(x * w, axis=-1)                         # (bt, S)

    # Numerically-stable softmax over the sequence axis (the 128-lane axis).
    s = s - jnp.max(s, axis=-1, keepdims=True)
    e = jnp.exp(s)
    denom = jnp.sum(e, axis=-1, keepdims=True)
    # approx=False keeps the 1e-5 comparison tolerance; approx=True (EUP vrcp)
    # is free at mem-bound if the tolerance can be relaxed.
    p = e * pl.reciprocal(denom, approx=False)          # (bt, S)

    # Weighted sum over S on the VPU (broadcast-multiply + sublane reduce).
    # Preferred over an M=1 batched MXU matmul: no per-batch matmul push /
    # MRF-drain latency on v5e/v6e, and it is trivially hidden under the DMA.
    out_ref[...] = jnp.sum(x * p[:, :, None], axis=1)   # (bt, D)


def _chip_info():
    """Return (vmem_ceiling_bytes, num_tensorcores) for the local TPU."""
    vmem_ceiling = 40 << 20   # conservative default (safe on v7x's 64 MiB)
    num_tc = 1
    try:
        kind = jax.devices()[0].device_kind.lower()
    except Exception:
        kind = ""
    if "v7" in kind:
        vmem_ceiling, num_tc = 44 << 20, 2
    elif "v5" in kind or "v6" in kind:
        vmem_ceiling = 96 << 20    # 128 MiB physical on v5e/v6e
    return vmem_ceiling, num_tc


def _pick_bt(B, S, D, itemsize, num_tc, target_bytes=3 << 20):
    """Batch-tile so the x block is ~2-4 MiB, sublane-aligned, and divides B."""
    row = max(S * D * itemsize, 1)
    bt = max(1, target_bytes // row)
    bt = min(bt, B)

    # v7x (2 TCs): keep the grid length >= 2*num_tc so megacore sharding is
    # balanced, but never shrink blocks below ~1 MiB (HBM-roofline penalty).
    if num_tc > 1 and B > bt:
        bt_cap = max(1, B // (2 * num_tc))
        if bt_cap * row >= (1 << 20):
            bt = min(bt, bt_cap)

    if bt >= B:
        return B
    # Align to a multiple of 8 for an unmasked vst on the (bt, D) output block.
    bt8 = (bt // 8) * 8
    while bt8 >= 8 and B % bt8 != 0:
        bt8 -= 8
    if bt8 >= 8:
        return bt8
    # Fall back to the largest divisor of B <= bt (masked stores: perf only).
    d = bt
    while d > 1 and B % d != 0:
        d -= 1
    return max(d, 1)


def attention_layer(x, wm, bm, wv, bv, *, bt=None):
    """x: (B, S, D); wm: (D, D); bm: (D,); wv: (1, D); bv: (1,). Returns (B, D)."""
    B, S, D = x.shape

    # Algebraic fusion of the two Linear layers (done once, outside kernel):
    #   s = (x @ wm.T + bm) @ wv.T + bv = x @ (wv @ wm).T + (wv @ bm + bv)
    # HIGHEST precision so the fused path matches the unfused f32 reference.
    # The fused scalar bias is dropped: softmax over S is shift-invariant.
    w_eff = jnp.dot(wv, wm, precision=jax.lax.Precision.HIGHEST)
    w_eff = w_eff.astype(jnp.float32)                                   # (1, D)

    vmem_ceiling, num_tc = _chip_info()
    itemsize = jnp.dtype(x.dtype).itemsize
    if bt is None:
        bt = _pick_bt(B, S, D, itemsize, num_tc)
    assert B % bt == 0, (B, bt)

    # VMEM budget: double-buffered x block + block-sized in-kernel temporaries
    # (x*w / x*p products, scores) + double-buffered output + slack.
    x_block = bt * S * D * itemsize
    needed = 4 * x_block + 2 * (bt * D * 4) + (4 << 20)
    vmem_limit = int(min(vmem_ceiling, max(32 << 20, needed)))

    # NOTE: for production shapes, streaming x / w_eff as bf16 roughly halves
    # HBM traffic (the kernel is bandwidth-bound after fusion); kept f32 here
    # to hold the 1e-5 comparison tolerance.
    # TODO(synk): add an S-tiled online-softmax (flash-style) path for shapes
    # where even a bt=1 block no longer fits v7x's 64 MiB VMEM.
    return pl.pallas_call(
        attention_kernel,
        out_shape=jax.ShapeDtypeStruct((B, D), jnp.float32),
        grid_spec=pltpu.PrefetchScalarGridSpec(
            num_scalar_prefetch=0,
            grid=(B // bt,),
            in_specs=[
                pl.BlockSpec((bt, S, D), lambda b: (b, 0, 0)),  # x: ~3 MiB tiles
                pl.BlockSpec((1, D), lambda b: (0, 0)),         # fused weight (tiny)
            ],
            out_specs=pl.BlockSpec((bt, D), lambda b: (b, 0)),
        ),
        compiler_params=pltpu.CompilerParams(
            dimension_semantics=("parallel",),
            vmem_limit_bytes=vmem_limit,
        ),
    )(x, w_eff)


def reference(x, wm, bm, wv, bv):
    h = jnp.einsum("bsd,ed->bse", x, wm) + bm
    s = jnp.einsum("bse,oe->bso", h, wv) + bv
    p = jax.nn.softmax(s, axis=1)
    return jnp.sum(x * p, axis=1)


if __name__ == "__main__":
    B, S, D = 2, 8, 32
    key = jax.random.PRNGKey(0)
    kx, kwm, kbm, kwv, kbv = jax.random.split(key, 5)

    x = jax.random.normal(kx, (B, S, D), dtype=jnp.float32)
    # Deterministic synthetic params (shapes match nn.Linear(D, D) / nn.Linear(D, 1))
    bound_m = 1.0 / (D ** 0.5)
    wm = jax.random.uniform(kwm, (D, D), minval=-bound_m, maxval=bound_m, dtype=jnp.float32)
    bm = jax.random.uniform(kbm, (D,), minval=-bound_m, maxval=bound_m, dtype=jnp.float32)
    wv = jax.random.uniform(kwv, (1, D), minval=-bound_m, maxval=bound_m, dtype=jnp.float32)
    bv = jax.random.uniform(kbv, (1,), minval=-bound_m, maxval=bound_m, dtype=jnp.float32)

    out = attention_layer(x, wm, bm, wv, bv)
    jax.block_until_ready(out)

    ref = reference(x, wm, bm, wv, bv)
    assert out.shape == (B, D)
    assert jnp.allclose(out, ref, atol=1e-5, rtol=1e-5)
    print("KERNEL_OK")
</pallas_src>

<mosaic_0001>
module attributes {stable_mosaic.version = 11 : i64} {
  func.func @attention_kernel(%arg0: i32, %arg1: memref<2x8x32xf32, #tpu.memory_space<vmem>>, %arg2: memref<1x32xf32, #tpu.memory_space<vmem>>, %arg3: memref<2x32xf32, #tpu.memory_space<vmem>>) attributes {dimension_semantics = [#tpu.dimension_semantics<parallel>], iteration_bounds = array<i64: 1>, scalar_prefetch = 0 : i64, scratch_operands = 0 : i64, tpu.core_type = #tpu.core_type<tc>, window_params = [{transform_indices = @transform_0, window_bounds = array<i64: 2, 8, 32>}, {pipeline_mode = #tpu.pipeline_mode<synchronous>, transform_indices = @transform_1, window_bounds = array<i64: 1, 32>}, {transform_indices = @transform_2, window_bounds = array<i64: 2, 32>}]} {
    %c0 = arith.constant 0 : index
    %c0_0 = arith.constant 0 : index
    %c0_1 = arith.constant 0 : index
    %0 = vector.load %arg1[%c0, %c0_0, %c0_1] : memref<2x8x32xf32, #tpu.memory_space<vmem>>, vector<2x8x32xf32>
    %c0_2 = arith.constant 0 : index
    %c0_3 = arith.constant 0 : index
    %1 = vector.load %arg2[%c0_2, %c0_3] : memref<1x32xf32, #tpu.memory_space<vmem>>, vector<1x32xf32>
    %2 = vector.shape_cast %1 : vector<1x32xf32> to vector<32xf32>
    %3 = vector.shape_cast %2 : vector<32xf32> to vector<1x1x32xf32>
    %4 = vector.broadcast %3 : vector<1x1x32xf32> to vector<2x8x32xf32>
    %5 = arith.mulf %0, %4 : vector<2x8x32xf32>
    %cst = arith.constant dense<0.000000e+00> : vector<2x8xf32>
    %6 = vector.multi_reduction <add>, %5, %cst [2] : vector<2x8x32xf32> to vector<2x8xf32>
    %cst_4 = arith.constant dense<0xFF800000> : vector<2xf32>
    %7 = vector.multi_reduction <maximumf>, %6, %cst_4 [1] : vector<2x8xf32> to vector<2xf32>
    %8 = vector.shape_cast %7 : vector<2xf32> to vector<2x1xf32>
    %9 = vector.broadcast %8 : vector<2x1xf32> to vector<2x8xf32>
    %10 = arith.subf %6, %9 : vector<2x8xf32>
    %11 = math.exp %10 : vector<2x8xf32>
    %cst_5 = arith.constant dense<0.000000e+00> : vector<2xf32>
    %12 = vector.multi_reduction <add>, %11, %cst_5 [1] : vector<2x8xf32> to vector<2xf32>
    %13 = vector.shape_cast %12 : vector<2xf32> to vector<2x1xf32>
    %14 = tpu.reciprocal %13 : vector<2x1xf32> -> vector<2x1xf32>
    %15 = vector.broadcast %14 : vector<2x1xf32> to vector<2x8xf32>
    %16 = arith.mulf %11, %15 : vector<2x8xf32>
    %17 = vector.shape_cast %16 : vector<2x8xf32> to vector<2x8x1xf32>
    %18 = vector.broadcast %17 : vector<2x8x1xf32> to vector<2x8x32xf32>
    %19 = arith.mulf %0, %18 : vector<2x8x32xf32>
    %cst_6 = arith.constant dense<0.000000e+00> : vector<2x32xf32>
    %20 = vector.multi_reduction <add>, %19, %cst_6 [1] : vector<2x8x32xf32> to vector<2x32xf32>
    %c0_7 = arith.constant 0 : index
    %c0_8 = arith.constant 0 : index
    %21 = vector.load %arg3[%c0_7, %c0_8] : memref<2x32xf32, #tpu.memory_space<vmem>>, vector<2x32xf32>
    tpu.vector_store %arg3[%c0_7, %c0_8], %20 {strides = array<i32>} : memref<2x32xf32, #tpu.memory_space<vmem>>, vector<2x32xf32>,
    return
  }
  func.func @transform_0(%arg0: i32) -> (i32, i32, i32) {
    %c0_i32 = arith.constant 0 : i32
    %c0_i32_0 = arith.constant 0 : i32
    %c0_i32_1 = arith.constant 0 : i32
    return %arg0, %c0_i32, %c0_i32_0 : i32, i32, i32
  }
  func.func @transform_1(%arg0: i32) -> (i32, i32) {
    %c0_i32 = arith.constant 0 : i32
    %c0_i32_0 = arith.constant 0 : i32
    %c0_i32_1 = arith.constant 0 : i32
    return %c0_i32, %c0_i32_0 : i32, i32
  }
  func.func @transform_2(%arg0: i32) -> (i32, i32) {
    %c0_i32 = arith.constant 0 : i32
    %c0_i32_0 = arith.constant 0 : i32
    return %arg0, %c0_i32 : i32, i32
  }
}

</mosaic_0001>

<llo_original>
// kernel: tpu_custom_call.1
$region0: #{tpu_custom_call.1}
  #allocation0 [shape = 'u32[]', space=smem, size = 0x4, offset = 0x4, fixed_abs, tag = 'smem constant byte address 0x4 - core index']
  #allocation1 [shape = 'u32[144,128]{1,0:T(1,128)}', space=vmem, size = 0x12000, scoped, tag = 'internal scratch']
  %s0 = inlined_call_operand.hbm [shape: f32[2,8,32], index: 0, kind: input, shape index: {}]
  %s1 = inlined_call_operand.vmem [shape: f32[1,32], index: 1, kind: input, shape index: {}]
  %s2 = inlined_call_operand.hbm [shape: f32[2,32], index: 2, kind: output, shape index: {}]
  %s3 = sld [smem:[#allocation0]]
  $region22: #{tpu_custom_call.1} parent=0
    _
  %s5 = ssub.s32 1, %s3
  %s6 = scalar_select 0, %s5, %s3
  $region1: #{tpu_custom_call.1} parent=0
    #allocation2 [shape = 'u8[8192]{0}', space=vmem, size = 0x2000, scoped, tag = 'input window, operand 0, single buffered']
    #allocation3 [shape = 's32[1]{0}', space=sflag, size = 0x4, scoped, tag = 'scoped memory for tpu_custom_call.1']
    #allocation4 [shape = 's32[1]{0}', space=sflag, size = 0x4, scoped, tag = 'scoped memory for tpu_custom_call.1']
    #allocation5 [shape = 'u8[1024]{0}', space=vmem, size = 0x400, scoped, tag = 'output window, operand 0, single buffered']
    %7 = vsyncpa [#allocation3], 0
    %8 = vsyncpa [#allocation4], 0
    // Predicated region
    $region2: #{tpu_custom_call.1} parent=1 // pred_check
      _
    $region3: #{tpu_custom_call.1} parent=1 // pred_check_branch
      %10 = sbr.rel (0) target = $region5
    $region4: #{tpu_custom_call.1} parent=1 // pred_region
      %s12 = ssub.s32 256, 256
      %13 = vsyncadd [#allocation3], %s12
      %s14 = sshll.u32 [#allocation2], 4
      %s15 = int_to_ptr.vmem [resolvable:$true] %s14
      %20 = dma.hbm_to_vmem [thread:$0]  %s0, 256, %s15, [#allocation3], 128, 128, 8
    $region5: #{tpu_custom_call.1} parent=1 // pred_fallthru
      _
    // Predicated region
    $region6: #{tpu_custom_call.1} parent=1 // pred_check
      _
    $region7: #{tpu_custom_call.1} parent=1 // pred_check_branch
      %22 = sbr.rel (0) target = $region9
    $region8: #{tpu_custom_call.1} parent=1 // pred_region
      _
    $region9: #{tpu_custom_call.1} parent=1 // pred_fallthru
      _
    // Predicated region
    $region10: #{tpu_custom_call.1} parent=1 // pred_check
      _
    $region11: #{tpu_custom_call.1} parent=1 // pred_check_branch
      %24 = sbr.rel (0) target = $region13
    $region12: #{tpu_custom_call.1} parent=1 // pred_region
      %25 = dma.done [#allocation3], 256
    $region13: #{tpu_custom_call.1} parent=1 // pred_fallthru
      _
    %v26 = vld [vmem:[#allocation2] sm:$0xff]
    %v27 = vld [vmem:[#allocation2 + $0x8] sm:$0xff]
    %v28 = vld [vmem:[%s1] sm:$0x1]
    %v30 = vlaneseq
    %v31 = vshrl.u32 %v30, 7
    %v32 = vsub.s32 0, %v31
    %v33 = vrot.slane %v28, %v32
    %v35 = vmul.f32 %v26, %v33
    %v36 = vmul.f32 %v27, %v33
    %vm37 = vcmask 261120
    %v38 = vsel %vm37, %v35, 0.0
    %39 = vadd.xlane.f32.xlu0 %v38
    %v40 = vpop.xlane.xlu0 %39
    %v41 = vsel %vm37, %v36, 0.0
    %42 = vadd.xlane.f32.xlu0 %v41
    %v43 = vpop.xlane.xlu0 %42
    %v46 = vlaneseq
    %v47 = vand.u32 %v46, 127
    %v48 = vlaneseq
    %v49 = vshrl.u32 %v48, 7
    %v50 = vsub.s32 %v47, %v49
    %v51 = vrot.slane %v40, %v50
    %v52 = vlaneseq
    %v53 = vshrl.u32 %v52, 7
    %v54 = vsub.s32 %v47, %v53
    %v55 = vrot.slane %v43, %v54
    %vm56 = vcmask 1041409
    %v57 = vsel %vm56, %v55, %v51
    %vm59 = vcmask 58368
    %v60 = vsel %vm59, %v57, -inf
    %61 = vmax.xlane.f32.xlu0 %v60
    %v62 = vpop.xlane.xlu0 %61
    %v64 = vlaneseq
    %v65 = vshrl.u32 %v64, 7
    %v66 = vsub.s32 0, %v65
    %v67 = vrot.slane %v62, %v66
    %v68 = vlaneseq
    %v69 = vshrl.u32 %v68, 7
    %v70 = vsub.s32 1, %v69
    %v71 = vrot.slane %v62, %v70
    %v74 = vsub.f32 %v40, %v67
    %v75 = vsub.f32 %v43, %v71
    %v76 = vmul.f32 %v74, 1.442695
    %v77 = vpow.pop %v76
    %v78 = vmul.f32 %v75, 1.442695
    %v79 = vpow.pop %v78
    %82 = vset.pattern.permute.xlu0 0
    %83 = vperm.xlu0 %82, %v77
    %v84 = vpop.permute.xlu0 %83
    %85 = vset.pattern.permute.xlu0 0
    %86 = vperm.xlu0 %85, %v79
    %v87 = vpop.permute.xlu0 %86
    %v88 = vlaneseq
    %v89 = vshrl.u32 %v88, 7
    %v90 = vsub.s32 %v47, %v89
    %v91 = vrot.slane %v84, %v90
    %v92 = vlaneseq
    %v93 = vshrl.u32 %v92, 7
    %v94 = vsub.s32 %v47, %v93
    %v95 = vrot.slane %v87, %v94
    %v96 = vsel %vm56, %v95, %v91
    %v98 = vsel %vm59, %v96, 0.0
    %99 = vadd.xlane.f32.xlu0 %v98
    %v100 = vpop.xlane.xlu0 %99
    %v101 = vrcp.pop %v100
    %v103 = vlaneseq
    %v104 = vshrl.u32 %v103, 7
    %v105 = vsub.s32 0, %v104
    %v106 = vrot.slane %v101, %v105
    %v107 = vlaneseq
    %v108 = vshrl.u32 %v107, 7
    %v109 = vsub.s32 1, %v108
    %v110 = vrot.slane %v101, %v109
    %v113 = vmul.f32 %v77, %v106
    %v114 = vmul.f32 %v79, %v110
    %116 = vset.pattern.permute.xlu0 0
    %117 = vperm.xlu0 %116, %v113
    %v118 = vpop.permute.xlu0 %117
    %121 = vset.pattern.permute.xlu0 0
    %122 = vperm.xlu0 %121, %v114
    %v123 = vpop.permute.xlu0 %122
    %v125 = vmul.f32 %v26, %v118
    %v126 = vmul.f32 %v27, %v123
    %v127 = vsel %vm37, %v125, 0.0
    %v128 = vrot.slane %v127, 4
    %v129 = vadd.f32 %v127, %v128
    %v130 = vrot.slane %v129, 2
    %v131 = vadd.f32 %v129, %v130
    %v132 = vrot.slane %v131, 1
    %v133 = vadd.f32 %v131, %v132
    %v134 = vsel %vm37, %v126, 0.0
    %v135 = vrot.slane %v134, 4
    %v136 = vadd.f32 %v134, %v135
    %v137 = vrot.slane %v136, 2
    %v138 = vadd.f32 %v136, %v137
    %v139 = vrot.slane %v138, 1
    %v140 = vadd.f32 %v138, %v139
    %v143 = vsel %vm56, %v140, %v133
    %vm145 = vcmask 254976
    %146 = vst.msk [vmem:[#allocation5] sm:$0x3] %vm145, %v143
    // Predicated region
    $region14: #{tpu_custom_call.1} parent=1 // pred_check
      _
    $region15: #{tpu_custom_call.1} parent=1 // pred_check_branch
      %148 = sbr.rel (0) target = $region17
    $region16: #{tpu_custom_call.1} parent=1 // pred_region
      %s150 = ssub.s32 32, 32
      %151 = vsyncadd [#allocation4], %s150
      %s153 = sshll.u32 [#allocation5], 4
      %s154 = int_to_ptr.vmem [resolvable:$true] %s153
      %156 = dma.vmem_to_hbm [thread:$0]  %s154, 32, %s2, [#allocation4]
    $region17: #{tpu_custom_call.1} parent=1 // pred_fallthru
      _
    // Predicated region
    $region18: #{tpu_custom_call.1} parent=1 // pred_check
      _
    $region19: #{tpu_custom_call.1} parent=1 // pred_check_branch
      %158 = sbr.rel (0) target = $region21
    $region20: #{tpu_custom_call.1} parent=1 // pred_region
      %159 = dma.done [#allocation4], 32
    $region21: #{tpu_custom_call.1} parent=1 // pred_fallthru
      _
    %160 = vsyncpa [#allocation3], 1
    %161 = vsyncpa [#allocation4], 1

</llo_original>
